<compile_context>
chip_gen: v6e
topology: v6e:2x2x1
jax: 0.10.0
libtpu: 0.0.40
codegen_flags: <defaults>
</compile_context>

<pallas_src>
import numpy as np
import jax
import jax.numpy as jnp
from jax import lax
from jax.experimental import pallas as pl
from jax.experimental.pallas import tpu as pltpu

NUM_CLASSES = 11      # module hardcodes channel 10 / label 11 handling
IGNORE_LABEL = 255    # ce_kwargs['ignore_index'] = ignore_label (default 255)
SMOOTH = 1e-5         # nnU-Net soft_dice_kwargs: batch_dice=True, smooth=1e-5, do_bg=False
DO_BG = False


def _make_kernel(partial_type, do_merge, n_out, tile, hw, tiles_per_split, needs_mask):
    partial_type = tuple(int(p) for p in partial_type)
    C = NUM_CLASSES

    def kernel(logits_ref, target_ref, tp_ref, sp_ref, so_ref, ce_ref):
        # Per-(batch, core-split) accumulators: reset on the first pixel tile.
        @pl.when(pl.program_id(2) == 0)
        def _init():
            tp_ref[...] = jnp.zeros_like(tp_ref)
            sp_ref[...] = jnp.zeros_like(sp_ref)
            so_ref[...] = jnp.zeros_like(so_ref)
            ce_ref[...] = jnp.zeros_like(ce_ref)

        x = logits_ref[...]                                     # (11, tile)
        # bf16 inputs stay bf16 through the bulk elementwise chain; anything
        # else is upcast to f32. Sums / log / divides / accumulators are f32.
        if x.dtype != jnp.bfloat16:
            x = x.astype(jnp.float32)
        tgt = target_ref[...]                                   # (1, tile) int32

        # class-row index column, built in-kernel (no captured constants)
        row_c = lax.broadcasted_iota(jnp.int32, (C, 1), 0)
        keep10 = row_c != 10                                    # zero channel 10

        if needs_mask:
            t_idx = pl.program_id(1) * tiles_per_split + pl.program_id(2)
            pix = t_idx * tile + lax.broadcasted_iota(jnp.int32, (1, tile), 1)
            valid_pix = pix < hw                                # (1, tile) bool
            keep = jnp.logical_and(keep10, valid_pix)           # fused with ch-10 mask
        else:
            valid_pix = None
            keep = keep10

        # fused: new_net_output[:, 10] = 0  (+ padded-tail sanitize)
        x = jnp.where(keep, x, 0)
        # target[target == 11] = 0
        tgt = jnp.where(tgt == 11, 0, tgt)

        # first softmax pieces over the 11 original classes
        m_c = jnp.max(x, axis=0, keepdims=True)                 # (1, tile), x.dtype
        e = jnp.exp(x - m_c).astype(jnp.float32)                # (11, tile) f32
        m32 = m_c.astype(jnp.float32)

        if do_merge:
            s = jnp.sum(e, axis=0, keepdims=True)               # (1, tile)
            # max prob over the non-partial ("merge") classes -> new background
            np_mask = row_c != partial_type[0]
            for p in partial_type[1:]:
                np_mask = jnp.logical_and(np_mask, row_c != p)
            merge_e = jnp.max(jnp.where(np_mask, e, 0.0), axis=0, keepdims=True)
            merge_bg = merge_e / s                              # exact divide, (1, tile)

            fg = [x[p:p + 1, :].astype(jnp.float32) for p in partial_type]
            max_fg = fg[0]
            for r in fg[1:]:
                max_fg = jnp.maximum(max_fg, r)
            m2 = jnp.maximum(merge_bg, max_fg)                  # = max(new_out)
            # reuse first-softmax exponentials: e2[p] = e[p] * exp(m - m2)
            # (assumes logit spread < ~80 so exp(m - m2) stays finite in f32)
            scale = jnp.exp(m32 - m2)                           # (1, tile)
            e2 = jnp.concatenate(
                [jnp.exp(merge_bg - m2)]
                + [e[p:p + 1, :] * scale for p in partial_type], axis=0)
            # new_output = cat([merged bg prob, raw logits of partial classes])
            new_out = jnp.concatenate([merge_bg] + fg, axis=0)  # (n_out, tile) f32
            # new_target: partial_type[i] -> i + 1, everything else -> 0
            new_tgt = jnp.zeros_like(tgt)
            for i, lab in enumerate(partial_type):
                new_tgt = jnp.where(tgt == lab, i + 1, new_tgt)
        else:
            new_out = x                                         # (11, tile)
            e2 = e
            m2 = m32
            new_tgt = tgt

        # shared softmax / log-softmax tail over the n_out new classes
        s2 = jnp.sum(e2, axis=0, keepdims=True)                 # (1, tile) f32
        p2 = e2 * (1.0 / s2)                                    # exact softmax probs

        row_o = lax.broadcasted_iota(jnp.int32, (n_out, 1), 0)
        oh_b = row_o == new_tgt                                 # (n_out, tile) bool
        valid_ce = new_tgt != IGNORE_LABEL                      # (1, tile) bool
        if needs_mask:
            oh_b = jnp.logical_and(oh_b, valid_pix)             # fused tail masking
            valid_ce = jnp.logical_and(valid_ce, valid_pix)
        onehot = oh_b.astype(jnp.float32)
        valid_ce_f = valid_ce.astype(jnp.float32)

        # cross entropy: -log_softmax at the target class (sum; mean in wrapper)
        t_logit = jnp.sum(onehot * new_out, axis=0, keepdims=True)  # (1, tile)
        ce_pix = m2 + jnp.log(s2) - t_logit                         # = -logp[target]
        ce_blk = jnp.sum(ce_pix * valid_ce_f, keepdims=True)        # (1, 1)
        cnt_blk = jnp.sum(valid_ce_f, keepdims=True)                # (1, 1)

        # dice statistics: tp, sum(p), sum(onehot); fp/fn derived in wrapper
        tp_ref[...] += jnp.sum(p2 * onehot, axis=1, keepdims=True)
        if needs_mask:
            sp_ref[...] += jnp.sum(p2 * valid_pix.astype(jnp.float32),
                                   axis=1, keepdims=True)
        else:
            sp_ref[...] += jnp.sum(p2, axis=1, keepdims=True)
        so_ref[...] += jnp.sum(onehot, axis=1, keepdims=True)
        ce_ref[0:1, :] += ce_blk
        ce_ref[1:2, :] += cnt_blk

    return kernel


def dc_ce_partial_mergeprob_loss_mots(net_output, target, partial_type, begin_ahm,
                                      aggregate="sum", tile_pixels=32768):
    # layout: channels-first per-batch slabs, NO transpose / NO host upcast:
    #   logits -> (N, 11, HW) view : kernel block (11, tile)
    #   target -> (N, 1,  HW) view : kernel block (1,  tile)
    N, C, H, W = net_output.shape
    assert C == NUM_CLASSES, "module semantics hardcode 11 classes (channel 10 / label 11)"
    assert tile_pixels % 128 == 0
    HW = H * W

    logits3d = net_output.reshape(N, C, HW)                 # free view, original dtype
    tgt3d = target.reshape(N, 1, HW).astype(jnp.int32)

    do_merge = int(begin_ahm) == 1
    partial_type = tuple(int(p) for p in partial_type)
    n_out = (1 + len(partial_type)) if do_merge else NUM_CLASSES

    if HW <= tile_pixels:
        tile = HW                                            # single full-row block
        n_tiles = 1
    else:
        tile = tile_pixels
        n_tiles = pl.cdiv(HW, tile)

    # 2-way split of the pixel-tile axis: on v7x (2 TCs/chip) this "parallel"
    # axis keeps both cores busy even when N == 1; on single-TC v5e/v6e it is
    # just an extra (harmless) loop level.
    splits = 2 if n_tiles >= 2 else 1
    tiles_per_split = pl.cdiv(n_tiles, splits)
    covered = splits * tiles_per_split * tile
    needs_mask = covered != HW                               # ragged / padded tiles
    clamp = splits * tiles_per_split > n_tiles               # OOB tiles on one split

    kernel = _make_kernel(partial_type, do_merge, n_out, tile, HW,
                          tiles_per_split, needs_mask)

    def tile_block(s, i):
        t = s * tiles_per_split + i
        if clamp:
            t = jnp.minimum(t, n_tiles - 1)   # stay in-bounds; kernel masks by pix>=HW
        return t

    in_specs = [
        pl.BlockSpec((None, C, tile), lambda n, s, i: (n, 0, tile_block(s, i))),
        pl.BlockSpec((None, 1, tile), lambda n, s, i: (n, 0, tile_block(s, i))),
    ]
    acc_spec = pl.BlockSpec((None, None, n_out, 1), lambda n, s, i: (n, s, 0, 0))
    ce_spec = pl.BlockSpec((None, None, 2, 1), lambda n, s, i: (n, s, 0, 0))

    tp_acc, sp_acc, so_acc, ce_acc = pl.pallas_call(
        kernel,
        out_shape=(
            jax.ShapeDtypeStruct((N, splits, n_out, 1), jnp.float32),  # tp
            jax.ShapeDtypeStruct((N, splits, n_out, 1), jnp.float32),  # sum(p)
            jax.ShapeDtypeStruct((N, splits, n_out, 1), jnp.float32),  # sum(onehot)
            jax.ShapeDtypeStruct((N, splits, 2, 1), jnp.float32),      # [ce_sum, count]
        ),
        grid_spec=pltpu.PrefetchScalarGridSpec(
            num_scalar_prefetch=0,
            grid=(N, splits, tiles_per_split),
            in_specs=in_specs,
            out_specs=[acc_spec, acc_spec, acc_spec, ce_spec],
        ),
        compiler_params=pltpu.CompilerParams(
            dimension_semantics=("parallel", "parallel", "arbitrary"),
            vmem_limit_bytes=32 * 1024 * 1024),
    )(logits3d, tgt3d)

    tp = jnp.sum(tp_acc[..., 0], axis=(0, 1))
    sum_p = jnp.sum(sp_acc[..., 0], axis=(0, 1))
    sum_oh = jnp.sum(so_acc[..., 0], axis=(0, 1))
    fp = sum_p - tp
    fn = sum_oh - tp
    ce_sum = jnp.sum(ce_acc[:, :, 0, 0])
    cnt = jnp.sum(ce_acc[:, :, 1, 0])

    # RobustCrossEntropyLoss: mean over non-ignored pixels
    ce_loss = ce_sum / jnp.maximum(cnt, 1.0)

    # SoftDiceLoss (batch_dice=True): tp/fp/fn already summed over batch + spatial
    nominator = 2.0 * tp + SMOOTH
    denominator = 2.0 * tp + fp + fn + SMOOTH
    dc = nominator / (denominator + 1e-8)
    if not DO_BG:
        dc = dc[1:]
    dc_loss = -jnp.mean(dc)

    if aggregate == "sum":
        return ce_loss + dc_loss
    elif aggregate == "ce":
        return ce_loss
    elif aggregate == "dc":
        return dc_loss
    else:
        raise NotImplementedError("nah son")


# ---------------------------------------------------------------------------
# Pure-JAX reference of the same forward semantics (for in-script validation).
# ---------------------------------------------------------------------------
def _reference_loss(net_output, target, partial_type, begin_ahm):
    N, C, H, W = net_output.shape
    partial_type = tuple(int(p) for p in partial_type)
    logits = net_output.astype(jnp.float32)
    logits = logits.at[:, 10].set(0.0)
    tgt = target.reshape(N, H, W).astype(jnp.int32)
    tgt = jnp.where(tgt == 11, 0, tgt)
    if int(begin_ahm) == 1:
        prob = jax.nn.softmax(logits, axis=1)
        merge_classes = [c for c in range(C) if c not in partial_type]
        merge_bg = jnp.max(prob[:, merge_classes], axis=1, keepdims=True)
        fg = logits[:, list(partial_type)]
        new_out = jnp.concatenate([merge_bg, fg], axis=1)
        new_tgt = jnp.zeros_like(tgt)
        for i, lab in enumerate(partial_type):
            new_tgt = jnp.where(tgt == lab, i + 1, new_tgt)
    else:
        new_out = logits
        new_tgt = tgt
    nc = new_out.shape[1]
    onehot = jax.nn.one_hot(new_tgt, nc, axis=1, dtype=jnp.float32)  # ignore -> zeros
    logp = jax.nn.log_softmax(new_out, axis=1)
    valid = (new_tgt != IGNORE_LABEL).astype(jnp.float32)
    ce_pix = -jnp.sum(onehot * logp, axis=1)
    ce_loss = jnp.sum(ce_pix * valid) / jnp.maximum(jnp.sum(valid), 1.0)
    p = jax.nn.softmax(new_out, axis=1)
    tp = jnp.sum(p * onehot, axis=(0, 2, 3))
    fp = jnp.sum(p * (1.0 - onehot), axis=(0, 2, 3))
    fn = jnp.sum((1.0 - p) * onehot, axis=(0, 2, 3))
    dc = (2.0 * tp + SMOOTH) / (2.0 * tp + fp + fn + SMOOTH + 1e-8)
    dc_loss = -jnp.mean(dc[1:])
    return ce_loss + dc_loss


if __name__ == "__main__":
    def run_case(key, n, h, w, begin_ahm, partial_type, tile_pixels,
                 dtype=jnp.float32, rtol=5e-3, atol=5e-3):
        k1, k2 = jax.random.split(key)
        net_output = jax.random.normal(k1, (n, NUM_CLASSES, h, w),
                                       dtype=jnp.float32).astype(dtype)
        # labels in [0, 11]; label 11 exercises the "target == 11 -> 0" remap path
        target = jax.random.randint(k2, (n, 1, h, w), 0, 12).astype(jnp.int32)
        # a few ignore-labelled pixels exercise the ignore_index=255 path
        target = target.at[:, :, 0, 0:3].set(IGNORE_LABEL)
        loss = dc_ce_partial_mergeprob_loss_mots(
            net_output, target, partial_type, begin_ahm, tile_pixels=tile_pixels)
        loss = jax.block_until_ready(loss)
        assert jnp.isfinite(loss)
        ref = _reference_loss(net_output, target, partial_type, begin_ahm)
        np.testing.assert_allclose(np.asarray(loss), np.asarray(ref),
                                   rtol=rtol, atol=atol)
        return loss

    key = jax.random.PRNGKey(0)
    key, sub = jax.random.split(key)
    run_case(sub, 2, 16, 16, begin_ahm=1, partial_type=(1, 3), tile_pixels=32768)
    key, sub = jax.random.split(key)
    run_case(sub, 2, 16, 16, begin_ahm=0, partial_type=(1, 3), tile_pixels=32768)
    # ragged pixel count + 2-way core split (HW=200, tile=128 -> 2 tiles, tail mask)
    key, sub = jax.random.split(key)
    run_case(sub, 2, 10, 20, begin_ahm=1, partial_type=(2, 5), tile_pixels=128)
    # odd tile count (HW=320, 3 tiles over 2 splits) -> clamped out-of-range block
    key, sub = jax.random.split(key)
    run_case(sub, 1, 10, 32, begin_ahm=1, partial_type=(2, 5), tile_pixels=128)
    # bf16 logits pass-through: bulk elementwise chain runs in bf16, f32 accumulators
    key, sub = jax.random.split(key)
    run_case(sub, 2, 16, 16, begin_ahm=1, partial_type=(1, 3), tile_pixels=32768,
             dtype=jnp.bfloat16, rtol=5e-2, atol=5e-2)

    print("KERNEL_OK")
</pallas_src>

<mosaic_0001>
module attributes {stable_mosaic.version = 11 : i64} {
  func.func @kernel(%arg0: i32, %arg1: i32, %arg2: i32, %arg3: memref<1x11x256xf32, #tpu.memory_space<vmem>>, %arg4: memref<1x1x256xi32, #tpu.memory_space<vmem>>, %arg5: memref<1x1x3x1xf32, #tpu.memory_space<vmem>>, %arg6: memref<1x1x3x1xf32, #tpu.memory_space<vmem>>, %arg7: memref<1x1x3x1xf32, #tpu.memory_space<vmem>>, %arg8: memref<1x1x2x1xf32, #tpu.memory_space<vmem>>) attributes {dimension_semantics = [#tpu.dimension_semantics<parallel>, #tpu.dimension_semantics<parallel>, #tpu.dimension_semantics<arbitrary>], iteration_bounds = array<i64: 2, 1, 1>, scalar_prefetch = 0 : i64, scratch_operands = 0 : i64, tpu.core_type = #tpu.core_type<tc>, window_params = [{transform_indices = @transform_0, window_bounds = array<i64: 1, 11, 256>}, {transform_indices = @transform_1, window_bounds = array<i64: 1, 1, 256>}, {transform_indices = @transform_2, window_bounds = array<i64: 1, 1, 3, 1>}, {transform_indices = @transform_3, window_bounds = array<i64: 1, 1, 3, 1>}, {transform_indices = @transform_4, window_bounds = array<i64: 1, 1, 3, 1>}, {transform_indices = @transform_5, window_bounds = array<i64: 1, 1, 2, 1>}]} {
    %c0_i32 = arith.constant 0 : i32
    %0 = arith.cmpi eq, %arg2, %c0_i32 : i32
    %1 = arith.extui %0 : i1 to i32
    %c0_i32_0 = arith.constant 0 : i32
    %2 = arith.cmpi ne, %1, %c0_i32_0 : i32
    scf.if %2 {
      %cst_62 = arith.constant 0.000000e+00 : f32
      %131 = vector.broadcast %cst_62 : f32 to vector<3x1xf32>
      %c0_63 = arith.constant 0 : index
      %c0_64 = arith.constant 0 : index
      %c0_65 = arith.constant 0 : index
      %c0_66 = arith.constant 0 : index
      %132 = vector.load %arg5[%c0_63, %c0_64, %c0_65, %c0_66] : memref<1x1x3x1xf32, #tpu.memory_space<vmem>>, vector<1x1x3x1xf32>
      %133 = vector.shape_cast %132 : vector<1x1x3x1xf32> to vector<3x1xf32>
      %134 = vector.shape_cast %131 : vector<3x1xf32> to vector<1x1x3x1xf32>
      tpu.vector_store %arg5[%c0_63, %c0_64, %c0_65, %c0_66], %134 {strides = array<i32>} : memref<1x1x3x1xf32, #tpu.memory_space<vmem>>, vector<1x1x3x1xf32>,
      %cst_67 = arith.constant 0.000000e+00 : f32
      %135 = vector.broadcast %cst_67 : f32 to vector<3x1xf32>
      %c0_68 = arith.constant 0 : index
      %c0_69 = arith.constant 0 : index
      %c0_70 = arith.constant 0 : index
      %c0_71 = arith.constant 0 : index
      %136 = vector.load %arg6[%c0_68, %c0_69, %c0_70, %c0_71] : memref<1x1x3x1xf32, #tpu.memory_space<vmem>>, vector<1x1x3x1xf32>
      %137 = vector.shape_cast %136 : vector<1x1x3x1xf32> to vector<3x1xf32>
      %138 = vector.shape_cast %135 : vector<3x1xf32> to vector<1x1x3x1xf32>
      tpu.vector_store %arg6[%c0_68, %c0_69, %c0_70, %c0_71], %138 {strides = array<i32>} : memref<1x1x3x1xf32, #tpu.memory_space<vmem>>, vector<1x1x3x1xf32>,
      %cst_72 = arith.constant 0.000000e+00 : f32
      %139 = vector.broadcast %cst_72 : f32 to vector<3x1xf32>
      %c0_73 = arith.constant 0 : index
      %c0_74 = arith.constant 0 : index
      %c0_75 = arith.constant 0 : index
      %c0_76 = arith.constant 0 : index
      %140 = vector.load %arg7[%c0_73, %c0_74, %c0_75, %c0_76] : memref<1x1x3x1xf32, #tpu.memory_space<vmem>>, vector<1x1x3x1xf32>
      %141 = vector.shape_cast %140 : vector<1x1x3x1xf32> to vector<3x1xf32>
      %142 = vector.shape_cast %139 : vector<3x1xf32> to vector<1x1x3x1xf32>
      tpu.vector_store %arg7[%c0_73, %c0_74, %c0_75, %c0_76], %142 {strides = array<i32>} : memref<1x1x3x1xf32, #tpu.memory_space<vmem>>, vector<1x1x3x1xf32>,
      %cst_77 = arith.constant 0.000000e+00 : f32
      %143 = vector.broadcast %cst_77 : f32 to vector<2x1xf32>
      %c0_78 = arith.constant 0 : index
      %c0_79 = arith.constant 0 : index
      %c0_80 = arith.constant 0 : index
      %c0_81 = arith.constant 0 : index
      %144 = vector.load %arg8[%c0_78, %c0_79, %c0_80, %c0_81] : memref<1x1x2x1xf32, #tpu.memory_space<vmem>>, vector<1x1x2x1xf32>
      %145 = vector.shape_cast %144 : vector<1x1x2x1xf32> to vector<2x1xf32>
      %146 = vector.shape_cast %143 : vector<2x1xf32> to vector<1x1x2x1xf32>
      tpu.vector_store %arg8[%c0_78, %c0_79, %c0_80, %c0_81], %146 {strides = array<i32>} : memref<1x1x2x1xf32, #tpu.memory_space<vmem>>, vector<1x1x2x1xf32>,
    } else {
    }
    %c0 = arith.constant 0 : index
    %c0_1 = arith.constant 0 : index
    %c0_2 = arith.constant 0 : index
    %3 = vector.load %arg3[%c0, %c0_1, %c0_2] : memref<1x11x256xf32, #tpu.memory_space<vmem>>, vector<1x11x256xf32>
    %4 = vector.shape_cast %3 : vector<1x11x256xf32> to vector<11x256xf32>
    %c0_3 = arith.constant 0 : index
    %c0_4 = arith.constant 0 : index
    %c0_5 = arith.constant 0 : index
    %5 = vector.load %arg4[%c0_3, %c0_4, %c0_5] : memref<1x1x256xi32, #tpu.memory_space<vmem>>, vector<1x1x256xi32>
    %6 = vector.shape_cast %5 : vector<1x1x256xi32> to vector<1x256xi32>
    %7 = tpu.iota {dimensions = array<i32: 0>} : vector<11x1xi32>
    %c10_i32 = arith.constant 10 : i32
    %8 = vector.broadcast %c10_i32 : i32 to vector<11x1xi32>
    %9 = arith.cmpi ne, %7, %8 : vector<11x1xi32>
    %c0_i32_6 = arith.constant 0 : i32
    %10 = arith.sitofp %c0_i32_6 : i32 to f32
    %11 = vector.shape_cast %9 : vector<11x1xi1> to vector<11x1xi1>
    %12 = vector.broadcast %11 : vector<11x1xi1> to vector<11x256xi1>
    %13 = vector.broadcast %10 : f32 to vector<11x256xf32>
    %14 = arith.select %12, %4, %13 : vector<11x256xi1>, vector<11x256xf32>
    %c11_i32 = arith.constant 11 : i32
    %15 = vector.broadcast %c11_i32 : i32 to vector<1x256xi32>
    %16 = arith.cmpi eq, %6, %15 : vector<1x256xi32>
    %c0_i32_7 = arith.constant 0 : i32
    %17 = vector.broadcast %c0_i32_7 : i32 to vector<1x256xi32>
    %18 = arith.select %16, %17, %6 : vector<1x256xi1>, vector<1x256xi32>
    %cst = arith.constant dense<0xFF800000> : vector<256xf32>
    %19 = vector.multi_reduction <maximumf>, %14, %cst [0] : vector<11x256xf32> to vector<256xf32>
    %20 = vector.shape_cast %19 : vector<256xf32> to vector<1x256xf32>
    %21 = vector.broadcast %20 : vector<1x256xf32> to vector<11x256xf32>
    %22 = arith.subf %14, %21 : vector<11x256xf32>
    %23 = math.exp %22 : vector<11x256xf32>
    %cst_8 = arith.constant dense<0.000000e+00> : vector<256xf32>
    %24 = vector.multi_reduction <add>, %23, %cst_8 [0] : vector<11x256xf32> to vector<256xf32>
    %25 = vector.shape_cast %24 : vector<256xf32> to vector<1x256xf32>
    %c1_i32 = arith.constant 1 : i32
    %26 = vector.broadcast %c1_i32 : i32 to vector<11x1xi32>
    %27 = arith.cmpi ne, %7, %26 : vector<11x1xi32>
    %c3_i32 = arith.constant 3 : i32
    %28 = vector.broadcast %c3_i32 : i32 to vector<11x1xi32>
    %29 = arith.cmpi ne, %7, %28 : vector<11x1xi32>
    %30 = arith.andi %27, %29 : vector<11x1xi1>
    %cst_9 = arith.constant 0.000000e+00 : f32
    %31 = vector.shape_cast %30 : vector<11x1xi1> to vector<11x1xi1>
    %32 = vector.broadcast %31 : vector<11x1xi1> to vector<11x256xi1>
    %33 = vector.broadcast %cst_9 : f32 to vector<11x256xf32>
    %34 = arith.select %32, %23, %33 : vector<11x256xi1>, vector<11x256xf32>
    %cst_10 = arith.constant dense<0xFF800000> : vector<256xf32>
    %35 = vector.multi_reduction <maximumf>, %34, %cst_10 [0] : vector<11x256xf32> to vector<256xf32>
    %36 = vector.shape_cast %35 : vector<256xf32> to vector<1x256xf32>
    %37 = arith.divf %36, %25 : vector<1x256xf32>
    %38 = vector.extract_strided_slice %14 {offsets = [1, 0], sizes = [1, 256], strides = [1, 1]} : vector<11x256xf32> to vector<1x256xf32>
    %39 = vector.extract_strided_slice %14 {offsets = [3, 0], sizes = [1, 256], strides = [1, 1]} : vector<11x256xf32> to vector<1x256xf32>
    %40 = arith.maximumf %38, %39 : vector<1x256xf32>
    %41 = arith.maximumf %37, %40 : vector<1x256xf32>
    %42 = arith.subf %20, %41 : vector<1x256xf32>
    %43 = math.exp %42 : vector<1x256xf32>
    %44 = arith.subf %37, %41 : vector<1x256xf32>
    %45 = math.exp %44 : vector<1x256xf32>
    %46 = vector.extract_strided_slice %23 {offsets = [1, 0], sizes = [1, 256], strides = [1, 1]} : vector<11x256xf32> to vector<1x256xf32>
    %47 = arith.mulf %46, %43 : vector<1x256xf32>
    %48 = vector.extract_strided_slice %23 {offsets = [3, 0], sizes = [1, 256], strides = [1, 1]} : vector<11x256xf32> to vector<1x256xf32>
    %49 = arith.mulf %48, %43 : vector<1x256xf32>
    %50 = tpu.concatenate %45, %47, %49 in 0 : vector<1x256xf32>, vector<1x256xf32>, vector<1x256xf32> -> vector<3x256xf32>
    %51 = tpu.concatenate %37, %38, %39 in 0 : vector<1x256xf32>, vector<1x256xf32>, vector<1x256xf32> -> vector<3x256xf32>
    %c0_i32_11 = arith.constant 0 : i32
    %52 = vector.broadcast %c0_i32_11 : i32 to vector<1x256xi32>
    %c1_i32_12 = arith.constant 1 : i32
    %53 = vector.broadcast %c1_i32_12 : i32 to vector<1x256xi32>
    %54 = arith.cmpi eq, %18, %53 : vector<1x256xi32>
    %c1_i32_13 = arith.constant 1 : i32
    %55 = vector.broadcast %c1_i32_13 : i32 to vector<1x256xi32>
    %56 = arith.select %54, %55, %52 : vector<1x256xi1>, vector<1x256xi32>
    %c3_i32_14 = arith.constant 3 : i32
    %57 = vector.broadcast %c3_i32_14 : i32 to vector<1x256xi32>
    %58 = arith.cmpi eq, %18, %57 : vector<1x256xi32>
    %c2_i32 = arith.constant 2 : i32
    %59 = vector.broadcast %c2_i32 : i32 to vector<1x256xi32>
    %60 = arith.select %58, %59, %56 : vector<1x256xi1>, vector<1x256xi32>
    %cst_15 = arith.constant dense<0.000000e+00> : vector<256xf32>
    %61 = vector.multi_reduction <add>, %50, %cst_15 [0] : vector<3x256xf32> to vector<256xf32>
    %62 = vector.shape_cast %61 : vector<256xf32> to vector<1x256xf32>
    %cst_16 = arith.constant 1.000000e+00 : f32
    %63 = vector.broadcast %cst_16 : f32 to vector<1x256xf32>
    %64 = arith.divf %63, %62 : vector<1x256xf32>
    %65 = vector.broadcast %64 : vector<1x256xf32> to vector<3x256xf32>
    %66 = arith.mulf %50, %65 : vector<3x256xf32>
    %67 = tpu.iota {dimensions = array<i32: 0>} : vector<3x1xi32>
    %68 = vector.broadcast %67 : vector<3x1xi32> to vector<3x256xi32>
    %69 = vector.broadcast %60 : vector<1x256xi32> to vector<3x256xi32>
    %70 = arith.cmpi eq, %68, %69 : vector<3x256xi32>
    %c255_i32 = arith.constant 255 : i32
    %71 = vector.broadcast %c255_i32 : i32 to vector<1x256xi32>
    %72 = arith.cmpi ne, %60, %71 : vector<1x256xi32>
    %73 = arith.extui %70 : vector<3x256xi1> to vector<3x256xi32>
    %74 = arith.sitofp %73 : vector<3x256xi32> to vector<3x256xf32>
    %75 = arith.extui %72 : vector<1x256xi1> to vector<1x256xi32>
    %76 = arith.sitofp %75 : vector<1x256xi32> to vector<1x256xf32>
    %77 = arith.mulf %74, %51 : vector<3x256xf32>
    %cst_17 = arith.constant dense<0.000000e+00> : vector<256xf32>
    %78 = vector.multi_reduction <add>, %77, %cst_17 [0] : vector<3x256xf32> to vector<256xf32>
    %79 = vector.shape_cast %78 : vector<256xf32> to vector<1x256xf32>
    %80 = math.log %62 : vector<1x256xf32>
    %81 = arith.addf %41, %80 : vector<1x256xf32>
    %82 = arith.subf %81, %79 : vector<1x256xf32>
    %83 = arith.mulf %82, %76 : vector<1x256xf32>
    %84 = vector.shape_cast %83 : vector<1x256xf32> to vector<1x1x256xf32>
    %cst_18 = arith.constant dense<0.000000e+00> : vector<1xf32>
    %85 = vector.multi_reduction <add>, %84, %cst_18 [1, 2] : vector<1x1x256xf32> to vector<1xf32>
    %86 = vector.shape_cast %85 : vector<1xf32> to vector<1x1x1xf32>
    %87 = vector.extract %86[0, 0, 0] : f32 from vector<1x1x1xf32>
    %88 = vector.broadcast %87 : f32 to vector<1x1xf32>
    %89 = vector.shape_cast %76 : vector<1x256xf32> to vector<1x1x256xf32>
    %cst_19 = arith.constant dense<0.000000e+00> : vector<1xf32>
    %90 = vector.multi_reduction <add>, %89, %cst_19 [1, 2] : vector<1x1x256xf32> to vector<1xf32>
    %91 = vector.shape_cast %90 : vector<1xf32> to vector<1x1x1xf32>
    %92 = vector.extract %91[0, 0, 0] : f32 from vector<1x1x1xf32>
    %93 = vector.broadcast %92 : f32 to vector<1x1xf32>
    %c0_20 = arith.constant 0 : index
    %c0_21 = arith.constant 0 : index
    %c0_22 = arith.constant 0 : index
    %c0_23 = arith.constant 0 : index
    %94 = vector.load %arg5[%c0_20, %c0_21, %c0_22, %c0_23] : memref<1x1x3x1xf32, #tpu.memory_space<vmem>>, vector<1x1x3x1xf32>
    %95 = vector.shape_cast %94 : vector<1x1x3x1xf32> to vector<3x1xf32>
    %96 = arith.mulf %66, %74 : vector<3x256xf32>
    %cst_24 = arith.constant dense<0.000000e+00> : vector<3xf32>
    %97 = vector.multi_reduction <add>, %96, %cst_24 [1] : vector<3x256xf32> to vector<3xf32>
    %98 = vector.shape_cast %97 : vector<3xf32> to vector<3x1xf32>
    %99 = arith.addf %95, %98 : vector<3x1xf32>
    %c0_25 = arith.constant 0 : index
    %c0_26 = arith.constant 0 : index
    %c0_27 = arith.constant 0 : index
    %c0_28 = arith.constant 0 : index
    %100 = vector.load %arg5[%c0_25, %c0_26, %c0_27, %c0_28] : memref<1x1x3x1xf32, #tpu.memory_space<vmem>>, vector<1x1x3x1xf32>
    %101 = vector.shape_cast %100 : vector<1x1x3x1xf32> to vector<3x1xf32>
    %102 = vector.shape_cast %99 : vector<3x1xf32> to vector<1x1x3x1xf32>
    tpu.vector_store %arg5[%c0_25, %c0_26, %c0_27, %c0_28], %102 {strides = array<i32>} : memref<1x1x3x1xf32, #tpu.memory_space<vmem>>, vector<1x1x3x1xf32>,
    %c0_29 = arith.constant 0 : index
    %c0_30 = arith.constant 0 : index
    %c0_31 = arith.constant 0 : index
    %c0_32 = arith.constant 0 : index
    %103 = vector.load %arg6[%c0_29, %c0_30, %c0_31, %c0_32] : memref<1x1x3x1xf32, #tpu.memory_space<vmem>>, vector<1x1x3x1xf32>
    %104 = vector.shape_cast %103 : vector<1x1x3x1xf32> to vector<3x1xf32>
    %cst_33 = arith.constant dense<0.000000e+00> : vector<3xf32>
    %105 = vector.multi_reduction <add>, %66, %cst_33 [1] : vector<3x256xf32> to vector<3xf32>
    %106 = vector.shape_cast %105 : vector<3xf32> to vector<3x1xf32>
    %107 = arith.addf %104, %106 : vector<3x1xf32>
    %c0_34 = arith.constant 0 : index
    %c0_35 = arith.constant 0 : index
    %c0_36 = arith.constant 0 : index
    %c0_37 = arith.constant 0 : index
    %108 = vector.load %arg6[%c0_34, %c0_35, %c0_36, %c0_37] : memref<1x1x3x1xf32, #tpu.memory_space<vmem>>, vector<1x1x3x1xf32>
    %109 = vector.shape_cast %108 : vector<1x1x3x1xf32> to vector<3x1xf32>
    %110 = vector.shape_cast %107 : vector<3x1xf32> to vector<1x1x3x1xf32>
    tpu.vector_store %arg6[%c0_34, %c0_35, %c0_36, %c0_37], %110 {strides = array<i32>} : memref<1x1x3x1xf32, #tpu.memory_space<vmem>>, vector<1x1x3x1xf32>,
    %c0_38 = arith.constant 0 : index
    %c0_39 = arith.constant 0 : index
    %c0_40 = arith.constant 0 : index
    %c0_41 = arith.constant 0 : index
    %111 = vector.load %arg7[%c0_38, %c0_39, %c0_40, %c0_41] : memref<1x1x3x1xf32, #tpu.memory_space<vmem>>, vector<1x1x3x1xf32>
    %112 = vector.shape_cast %111 : vector<1x1x3x1xf32> to vector<3x1xf32>
    %cst_42 = arith.constant dense<0.000000e+00> : vector<3xf32>
    %113 = vector.multi_reduction <add>, %74, %cst_42 [1] : vector<3x256xf32> to vector<3xf32>
    %114 = vector.shape_cast %113 : vector<3xf32> to vector<3x1xf32>
    %115 = arith.addf %112, %114 : vector<3x1xf32>
    %c0_43 = arith.constant 0 : index
    %c0_44 = arith.constant 0 : index
    %c0_45 = arith.constant 0 : index
    %c0_46 = arith.constant 0 : index
    %116 = vector.load %arg7[%c0_43, %c0_44, %c0_45, %c0_46] : memref<1x1x3x1xf32, #tpu.memory_space<vmem>>, vector<1x1x3x1xf32>
    %117 = vector.shape_cast %116 : vector<1x1x3x1xf32> to vector<3x1xf32>
    %118 = vector.shape_cast %115 : vector<3x1xf32> to vector<1x1x3x1xf32>
    tpu.vector_store %arg7[%c0_43, %c0_44, %c0_45, %c0_46], %118 {strides = array<i32>} : memref<1x1x3x1xf32, #tpu.memory_space<vmem>>, vector<1x1x3x1xf32>,
    %c0_47 = arith.constant 0 : index
    %c0_48 = arith.constant 0 : index
    %c0_49 = arith.constant 0 : index
    %c0_50 = arith.constant 0 : index
    %119 = vector.load %arg8[%c0_47, %c0_48, %c0_49, %c0_50] : memref<1x1x2x1xf32, #tpu.memory_space<vmem>>, vector<1x1x1x1xf32>
    %120 = vector.shape_cast %119 : vector<1x1x1x1xf32> to vector<1x1xf32>
    %121 = arith.addf %120, %88 : vector<1x1xf32>
    %c0_51 = arith.constant 0 : index
    %c0_52 = arith.constant 0 : index
    %c0_53 = arith.constant 0 : index
    %c0_54 = arith.constant 0 : index
    %122 = vector.load %arg8[%c0_51, %c0_52, %c0_53, %c0_54] : memref<1x1x2x1xf32, #tpu.memory_space<vmem>>, vector<1x1x1x1xf32>
    %123 = vector.shape_cast %122 : vector<1x1x1x1xf32> to vector<1x1xf32>
    %124 = vector.shape_cast %121 : vector<1x1xf32> to vector<1x1x1x1xf32>
    tpu.vector_store %arg8[%c0_51, %c0_52, %c0_53, %c0_54], %124 {strides = array<i32>} : memref<1x1x2x1xf32, #tpu.memory_space<vmem>>, vector<1x1x1x1xf32>,
    %c0_55 = arith.constant 0 : index
    %c0_56 = arith.constant 0 : index
    %c1 = arith.constant 1 : index
    %c0_57 = arith.constant 0 : index
    %125 = vector.load %arg8[%c0_55, %c0_56, %c1, %c0_57] : memref<1x1x2x1xf32, #tpu.memory_space<vmem>>, vector<1x1x1x1xf32>
    %126 = vector.shape_cast %125 : vector<1x1x1x1xf32> to vector<1x1xf32>
    %127 = arith.addf %126, %93 : vector<1x1xf32>
    %c0_58 = arith.constant 0 : index
    %c0_59 = arith.constant 0 : index
    %c1_60 = arith.constant 1 : index
    %c0_61 = arith.constant 0 : index
    %128 = vector.load %arg8[%c0_58, %c0_59, %c1_60, %c0_61] : memref<1x1x2x1xf32, #tpu.memory_space<vmem>>, vector<1x1x1x1xf32>
    %129 = vector.shape_cast %128 : vector<1x1x1x1xf32> to vector<1x1xf32>
    %130 = vector.shape_cast %127 : vector<1x1xf32> to vector<1x1x1x1xf32>
    tpu.vector_store %arg8[%c0_58, %c0_59, %c1_60, %c0_61], %130 {strides = array<i32>} : memref<1x1x2x1xf32, #tpu.memory_space<vmem>>, vector<1x1x1x1xf32>,
    return
  }
  func.func @transform_0(%arg0: i32, %arg1: i32, %arg2: i32) -> (i32, i32, i32) {
    %c1_i32 = arith.constant 1 : i32
    %0 = arith.muli %arg1, %c1_i32 : i32
    %1 = arith.addi %0, %arg2 : i32
    %c0_i32 = arith.constant 0 : i32
    %c0_i32_0 = arith.constant 0 : i32
    return %arg0, %c0_i32, %1 : i32, i32, i32
  }
  func.func @transform_1(%arg0: i32, %arg1: i32, %arg2: i32) -> (i32, i32, i32) {
    %c1_i32 = arith.constant 1 : i32
    %0 = arith.muli %arg1, %c1_i32 : i32
    %1 = arith.addi %0, %arg2 : i32
    %c0_i32 = arith.constant 0 : i32
    %c0_i32_0 = arith.constant 0 : i32
    return %arg0, %c0_i32, %1 : i32, i32, i32
  }
  func.func @transform_2(%arg0: i32, %arg1: i32, %arg2: i32) -> (i32, i32, i32, i32) {
    %c0_i32 = arith.constant 0 : i32
    %c0_i32_0 = arith.constant 0 : i32
    %c0_i32_1 = arith.constant 0 : i32
    return %arg0, %arg1, %c0_i32, %c0_i32_0 : i32, i32, i32, i32
  }
  func.func @transform_3(%arg0: i32, %arg1: i32, %arg2: i32) -> (i32, i32, i32, i32) {
    %c0_i32 = arith.constant 0 : i32
    %c0_i32_0 = arith.constant 0 : i32
    %c0_i32_1 = arith.constant 0 : i32
    return %arg0, %arg1, %c0_i32, %c0_i32_0 : i32, i32, i32, i32
  }
  func.func @transform_4(%arg0: i32, %arg1: i32, %arg2: i32) -> (i32, i32, i32, i32) {
    %c0_i32 = arith.constant 0 : i32
    %c0_i32_0 = arith.constant 0 : i32
    %c0_i32_1 = arith.constant 0 : i32
    return %arg0, %arg1, %c0_i32, %c0_i32_0 : i32, i32, i32, i32
  }
  func.func @transform_5(%arg0: i32, %arg1: i32, %arg2: i32) -> (i32, i32, i32, i32) {
    %c0_i32 = arith.constant 0 : i32
    %c0_i32_0 = arith.constant 0 : i32
    %c0_i32_1 = arith.constant 0 : i32
    return %arg0, %arg1, %c0_i32, %c0_i32_0 : i32, i32, i32, i32
  }
}

</mosaic_0001>

<llo_original>
// kernel: tpu_custom_call.1
$region0: #{tpu_custom_call.1}
  #allocation0 [shape = 'u32[]', space=smem, size = 0x4, offset = 0x4, fixed_abs, tag = 'smem constant byte address 0x4 - core index']
  #allocation1 [shape = 'u32[144,128]{1,0:T(1,128)}', space=vmem, size = 0x12000, scoped, tag = 'internal scratch']
  %s0 = inlined_call_operand.vmem [shape: f32[2,11,256], index: 0, kind: input, shape index: {}]
  %s1 = inlined_call_operand.vmem [shape: s32[2,1,256], index: 1, kind: input, shape index: {}]
  %s2 = inlined_call_operand.vmem [shape: f32[2,1,3,1], index: 2, kind: output, shape index: {0}]
  %s3 = inlined_call_operand.vmem [shape: f32[2,1,3,1], index: 3, kind: output, shape index: {1}]
  %s4 = inlined_call_operand.vmem [shape: f32[2,1,3,1], index: 4, kind: output, shape index: {2}]
  %s5 = inlined_call_operand.vmem [shape: f32[2,1,2,1], index: 5, kind: output, shape index: {3}]
  %6 = xla_tuple %s2, %s3, %s4, %s5
  %s7 = sld [smem:[#allocation0]]
  $region69: #{tpu_custom_call.1} parent=0
    _
  %s9 = ssub.s32 1, %s7
  %s10 = scalar_select 0, %s9, %s7
  loop: start=0, step=1, limit=4
  $region2: #{tpu_custom_call.1} parent=0 // loop_pre_header
    _
  $region3: #{tpu_custom_call.1} parent=0 // loop_header
    %s12 = sphi 0, %s16
    %p13 = scmp.ge.s32.totalorder %s12, 4
    %s19 = sphi 0, %s38
    %s20 = sphi 0, %s34
    %s21 = sphi 0, %s30
    %s22 = sphi 0, %s19
    %s23 = sphi 0, %s20
    %s24 = sphi 0, %s21
    %s25 = sphi 0, %s22
    %s26 = sphi 0, %s23
    %s27 = sphi 0, %s24
    %s45 = sphi 0, %s47
    %s48 = sphi 0, %s45
    %s49 = sphi 0, %s48
    %s65 = sphi 0, %s49
    %s75 = sphi 0, %s77
    %s78 = sphi 0, %s75
    %s79 = sphi 0, %s78
    %s95 = sphi 0, %s79
    %s103 = sphi 0, %s105
    %s106 = sphi 0, %s103
    %s107 = sphi 0, %s106
    %s123 = sphi 0, %s107
    %s131 = sphi 0, %s133
    %s134 = sphi 0, %s131
    %s135 = sphi 0, %s134
    %s151 = sphi 0, %s135
    %s159 = sphi 0, %s161
    %s162 = sphi 0, %s159
    %s163 = sphi 0, %s162
    %s179 = sphi 0, %s163
    %s187 = sphi 0, %s189
    %s190 = sphi 0, %s187
    %s191 = sphi 0, %s190
    %s207 = sphi 0, %s191
  $region4: #{tpu_custom_call.1} parent=0 // loop_header_branch
    %15 = sbr.rel (%p13) target = $region8
  $region5: #{tpu_custom_call.1} parent=0 // loop_body
    %s17 = ssub.s32 %s12, 1
    %s18 = ssub.s32 %s12, 2
    %s28 = sadd.s32 1, %s21
    %p29 = scmp.ge.s32.totalorder %s28, 1
    %s30 = scalar_select %p29, 0, %s28
    %s31 = sadd.s32 1, %s20
    %s32 = scalar_select %p29, %s31, %s20
    %p33 = scmp.ge.s32.totalorder %s32, 1
    %s34 = scalar_select %p33, 0, %s32
    %s35 = sadd.s32 1, %s19
    %s36 = scalar_select %p33, %s35, %s19
    %p37 = scmp.ge.s32.totalorder %s36, 2
    %s38 = scalar_select %p37, 0, %s36
    %s39 = sadd.s32 %s20, %s21
    %s40 = sadd.s32 %s34, %s30
    %s41 = ssub.s32 %s19, %s38
    %s42 = ssub.s32 %s39, %s40
    %s43 = sor.u32 %s41, %s42
    %p44 = scmp.eq.s32.totalorder %s43, 0
    %s46 = sadd.s32 %s45, 1
    %s47 = scalar_select %p44, %s45, %s46
    %p50 = pneg %p44
    %p51 = scmp.eq.s32.totalorder %s12, 1
    %p52 = por %p50, %p51
    %p53 = scmp.ne.s32.totalorder %s45, %s48
    %p54 = scmp.eq.s32.totalorder %s12, 0
    %p55 = por %p53, %p54
    %p56 = scmp.ne.s32.totalorder %s45, %s48
    %p57 = scmp.eq.s32.totalorder %s17, 1
    %p58 = por %p56, %p57
    %p59 = scmp.ne.s32.totalorder %s48, %s49
    %p60 = scmp.eq.s32.totalorder %s17, 0
    %p61 = por %p59, %p60
    %p62 = scmp.ne.s32.totalorder %s48, %s49
    %p63 = scmp.eq.s32.totalorder %s18, 1
    %p64 = por %p62, %p63
    %p66 = scmp.ne.s32.totalorder %s49, %s65
    %p67 = scmp.eq.s32.totalorder %s18, 0
    %p68 = por %p66, %p67
    %s69 = sadd.s32 %s20, %s21
    %s70 = sadd.s32 %s34, %s30
    %s71 = ssub.s32 %s19, %s38
    %s72 = ssub.s32 %s69, %s70
    %s73 = sor.u32 %s71, %s72
    %p74 = scmp.eq.s32.totalorder %s73, 0
    %s76 = sadd.s32 %s75, 1
    %s77 = scalar_select %p74, %s75, %s76
    %p80 = pneg %p74
    %p81 = scmp.eq.s32.totalorder %s12, 1
    %p82 = por %p80, %p81
    %p83 = scmp.ne.s32.totalorder %s75, %s78
    %p84 = scmp.eq.s32.totalorder %s12, 0
    %p85 = por %p83, %p84
    %p86 = scmp.ne.s32.totalorder %s75, %s78
    %p87 = scmp.eq.s32.totalorder %s17, 1
    %p88 = por %p86, %p87
    %p89 = scmp.ne.s32.totalorder %s78, %s79
    %p90 = scmp.eq.s32.totalorder %s17, 0
    %p91 = por %p89, %p90
    %p92 = scmp.ne.s32.totalorder %s78, %s79
    %p93 = scmp.eq.s32.totalorder %s18, 1
    %p94 = por %p92, %p93
    %p96 = scmp.ne.s32.totalorder %s79, %s95
    %p97 = scmp.eq.s32.totalorder %s18, 0
    %p98 = por %p96, %p97
    %s99 = ssub.s32 %s19, %s38
    %s100 = ssub.s32 %s20, %s34
    %s101 = sor.u32 %s99, %s100
    %p102 = scmp.eq.s32.totalorder %s101, 0
    %s104 = sadd.s32 %s103, 1
    %s105 = scalar_select %p102, %s103, %s104
    %p108 = pneg %p102
    %p109 = scmp.eq.s32.totalorder %s12, 1
    %p110 = por %p108, %p109
    %p111 = scmp.ne.s32.totalorder %s103, %s106
    %p112 = scmp.eq.s32.totalorder %s12, 0
    %p113 = por %p111, %p112
    %p114 = scmp.ne.s32.totalorder %s103, %s106
    %p115 = scmp.eq.s32.totalorder %s17, 1
    %p116 = por %p114, %p115
    %p117 = scmp.ne.s32.totalorder %s106, %s107
    %p118 = scmp.eq.s32.totalorder %s17, 0
    %p119 = por %p117, %p118
    %p120 = scmp.ne.s32.totalorder %s106, %s107
    %p121 = scmp.eq.s32.totalorder %s18, 1
    %p122 = por %p120, %p121
    %p124 = scmp.ne.s32.totalorder %s107, %s123
    %p125 = scmp.eq.s32.totalorder %s18, 0
    %p126 = por %p124, %p125
    %s127 = ssub.s32 %s19, %s38
    %s128 = ssub.s32 %s20, %s34
    %s129 = sor.u32 %s127, %s128
    %p130 = scmp.eq.s32.totalorder %s129, 0
    %s132 = sadd.s32 %s131, 1
    %s133 = scalar_select %p130, %s131, %s132
    %p136 = pneg %p130
    %p137 = scmp.eq.s32.totalorder %s12, 1
    %p138 = por %p136, %p137
    %p139 = scmp.ne.s32.totalorder %s131, %s134
    %p140 = scmp.eq.s32.totalorder %s12, 0
    %p141 = por %p139, %p140
    %p142 = scmp.ne.s32.totalorder %s131, %s134
    %p143 = scmp.eq.s32.totalorder %s17, 1
    %p144 = por %p142, %p143
    %p145 = scmp.ne.s32.totalorder %s134, %s135
    %p146 = scmp.eq.s32.totalorder %s17, 0
    %p147 = por %p145, %p146
    %p148 = scmp.ne.s32.totalorder %s134, %s135
    %p149 = scmp.eq.s32.totalorder %s18, 1
    %p150 = por %p148, %p149
    %p152 = scmp.ne.s32.totalorder %s135, %s151
    %p153 = scmp.eq.s32.totalorder %s18, 0
    %p154 = por %p152, %p153
    %s155 = ssub.s32 %s19, %s38
    %s156 = ssub.s32 %s20, %s34
    %s157 = sor.u32 %s155, %s156
    %p158 = scmp.eq.s32.totalorder %s157, 0
    %s160 = sadd.s32 %s159, 1
    %s161 = scalar_select %p158, %s159, %s160
    %p164 = pneg %p158
    %p165 = scmp.eq.s32.totalorder %s12, 1
    %p166 = por %p164, %p165
    %p167 = scmp.ne.s32.totalorder %s159, %s162
    %p168 = scmp.eq.s32.totalorder %s12, 0
    %p169 = por %p167, %p168
    %p170 = scmp.ne.s32.totalorder %s159, %s162
    %p171 = scmp.eq.s32.totalorder %s17, 1
    %p172 = por %p170, %p171
    %p173 = scmp.ne.s32.totalorder %s162, %s163
    %p174 = scmp.eq.s32.totalorder %s17, 0
    %p175 = por %p173, %p174
    %p176 = scmp.ne.s32.totalorder %s162, %s163
    %p177 = scmp.eq.s32.totalorder %s18, 1
    %p178 = por %p176, %p177
    %p180 = scmp.ne.s32.totalorder %s163, %s179
    %p181 = scmp.eq.s32.totalorder %s18, 0
    %p182 = por %p180, %p181
    %s183 = ssub.s32 %s19, %s38
    %s184 = ssub.s32 %s20, %s34
    %s185 = sor.u32 %s183, %s184
    %p186 = scmp.eq.s32.totalorder %s185, 0
    %s188 = sadd.s32 %s187, 1
    %s189 = scalar_select %p186, %s187, %s188
    %p192 = pneg %p186
    %p193 = scmp.eq.s32.totalorder %s12, 1
    %p194 = por %p192, %p193
    %p195 = scmp.ne.s32.totalorder %s187, %s190
    %p196 = scmp.eq.s32.totalorder %s12, 0
    %p197 = por %p195, %p196
    %p198 = scmp.ne.s32.totalorder %s187, %s190
    %p199 = scmp.eq.s32.totalorder %s17, 1
    %p200 = por %p198, %p199
    %p201 = scmp.ne.s32.totalorder %s190, %s191
    %p202 = scmp.eq.s32.totalorder %s17, 0
    %p203 = por %p201, %p202
    %p204 = scmp.ne.s32.totalorder %s190, %s191
    %p205 = scmp.eq.s32.totalorder %s18, 1
    %p206 = por %p204, %p205
    %p208 = scmp.ne.s32.totalorder %s191, %s207
    %p209 = scmp.eq.s32.totalorder %s18, 0
    %p210 = por %p208, %p209
    %p211 = scmp.le.s32.totalorder 1, %s12
    %p212 = scmp.lt.s32.totalorder %s12, 3
    %p213 = pnand %p211, %p212
    %p214 = pneg %p213
    // Predicated region
    $region9: #{tpu_custom_call.1} parent=5 // pred_check
      _
    $region10: #{tpu_custom_call.1} parent=5 // pred_check_branch
      %216 = sbr.rel (%p213) target = $region12
    $region11: #{tpu_custom_call.1} parent=5 // pred_region
      %s217 = ssub.s32 %s12, 1
    $region12: #{tpu_custom_call.1} parent=5 // pred_fallthru
      _
    %p218 = scmp.lt.s32.totalorder %s12, 2
    // Predicated region
    $region13: #{tpu_custom_call.1} parent=5 // pred_check
      %p219 = pneg %p218
    $region14: #{tpu_custom_call.1} parent=5 // pred_check_branch
      %221 = sbr.rel (%p219) target = $region16
    $region15: #{tpu_custom_call.1} parent=5 // pred_region
      // Predicated region
      $region17: #{tpu_custom_call.1} parent=15 // pred_check
        %p222 = pneg %p55
      $region18: #{tpu_custom_call.1} parent=15 // pred_check_branch
        %224 = sbr.rel (%p222) target = $region20
      $region19: #{tpu_custom_call.1} parent=15 // pred_region
        %s225 = sadd.s32 %s20, %s21
        %s226 = smul.u32 2, %s225
        %p227 = scmp.lt.s32.totalorder %s19, 1
        %s228 = scalar_select %p227, %s19, 1
        %p229 = scmp.lt.s32.totalorder %s226, 1
        %s230 = scalar_select %p229, %s226, 1
        %s231 = smul.addr %s228, 4
        %s232 = sadd.s32 %s230, %s231
        %s233 = smul.addr %s232, 8
        %s234 = scalar_lea.vmem %s0, %s233
        %s235 = sadd.s32 %s20, %s21
        %s236 = smul.u32 2, %s235
      $region20: #{tpu_custom_call.1} parent=15 // pred_fallthru
        _
      // Predicated region
      $region21: #{tpu_custom_call.1} parent=15 // pred_check
        %p237 = pneg %p85
      $region22: #{tpu_custom_call.1} parent=15 // pred_check_branch
        %239 = sbr.rel (%p237) target = $region24
      $region23: #{tpu_custom_call.1} parent=15 // pred_region
        %s240 = sadd.s32 %s20, %s21
        %s241 = smul.u32 2, %s240
        %p242 = scmp.lt.s32.totalorder %s19, 1
        %s243 = scalar_select %p242, %s19, 1
        %p244 = scmp.lt.s32.totalorder %s241, 1
        %s245 = scalar_select %p244, %s241, 1
        %s246 = smul.addr %s243, 2
        %s247 = sadd.s32 %s245, %s246
        %s248 = scalar_lea.vmem %s1, %s247
        %s249 = sadd.s32 %s20, %s21
        %s250 = smul.u32 2, %s249
      $region24: #{tpu_custom_call.1} parent=15 // pred_fallthru
        _
    $region16: #{tpu_custom_call.1} parent=5 // pred_fallthru
      _
    %p251 = scmp.le.s32.totalorder 1, %s12
    %p252 = scmp.lt.s32.totalorder %s12, 3
    %p253 = pnand %p251, %p252
    %p254 = pneg %p253
    // Predicated region
    $region25: #{tpu_custom_call.1} parent=5 // pred_check
      _
    $region26: #{tpu_custom_call.1} parent=5 // pred_check_branch
      %256 = sbr.rel (%p253) target = $region28
    $region27: #{tpu_custom_call.1} parent=5 // pred_region
      %s257 = ssub.s32 %s12, 1
      %s258 = sadd.s32 %s23, %s24
      %s259 = smul.u32 2, %s258
      %p260 = scmp.lt.s32.totalorder %s22, 1
      %s261 = scalar_select %p260, %s22, 1
      %p262 = scmp.lt.s32.totalorder %s259, 1
      %s263 = scalar_select %p262, %s259, 1
      %s264 = smul.addr %s261, 4
      %s265 = sadd.s32 %s263, %s264
      %s266 = smul.addr %s265, 8
      %s267 = scalar_lea.vmem %s0, %s266
      %p268 = pneg %p61
      %p269 = pneg %p58
      %s270 = sadd.s32 %s23, %s24
      %s271 = smul.u32 2, %s270
      %p272 = scmp.lt.s32.totalorder %s22, 1
      %s273 = scalar_select %p272, %s22, 1
      %p274 = scmp.lt.s32.totalorder %s271, 1
      %s275 = scalar_select %p274, %s271, 1
      %s276 = smul.addr %s273, 2
      %s277 = sadd.s32 %s275, %s276
      %s278 = scalar_lea.vmem %s1, %s277
      %p279 = pneg %p91
      %p280 = pneg %p88
      %p281 = pneg %p119
      %p282 = pneg %p116
      %p283 = scmp.lt.s32.totalorder %s22, 1
      %s284 = scalar_select %p283, %s22, 1
      %p285 = scmp.lt.s32.totalorder %s23, 0
      %s286 = scalar_select %p285, %s23, 0
      %s287 = sadd.s32 %s286, %s284
      %s288 = smul.addr %s287, 4
      %s289 = scalar_lea.vmem %s2, %s288
      %p290 = pneg %p147
      %p291 = pneg %p144
      %p292 = scmp.lt.s32.totalorder %s22, 1
      %s293 = scalar_select %p292, %s22, 1
      %p294 = scmp.lt.s32.totalorder %s23, 0
      %s295 = scalar_select %p294, %s23, 0
      %s296 = sadd.s32 %s295, %s293
      %s297 = smul.addr %s296, 4
      %s298 = scalar_lea.vmem %s3, %s297
      %p299 = pneg %p175
      %p300 = pneg %p172
      %p301 = scmp.lt.s32.totalorder %s22, 1
      %s302 = scalar_select %p301, %s22, 1
      %p303 = scmp.lt.s32.totalorder %s23, 0
      %s304 = scalar_select %p303, %s23, 0
      %s305 = sadd.s32 %s304, %s302
      %s306 = smul.addr %s305, 4
      %s307 = scalar_lea.vmem %s4, %s306
      %p308 = pneg %p203
      %p309 = pneg %p200
      %p310 = scmp.lt.s32.totalorder %s22, 1
      %s311 = scalar_select %p310, %s22, 1
      %p312 = scmp.lt.s32.totalorder %s23, 0
      %s313 = scalar_select %p312, %s23, 0
      %s314 = sadd.s32 %s313, %s311
      %s315 = smul.addr %s314, 2
      %s316 = scalar_lea.vmem %s5, %s315
      %s317 = sadd.s32 %s23, %s24
      %s318 = smul.u32 2, %s317
      %p319 = scmp.lt.s32.totalorder %s22, 1
      %s320 = scalar_select %p319, %s22, 1
      %p321 = scmp.lt.s32.totalorder %s318, 1
      %s322 = scalar_select %p321, %s318, 1
      %s323 = smul.addr %s320, 4
      %s324 = sadd.s32 %s322, %s323
      %s325 = smul.addr %s324, 8
      %s326 = scalar_lea.vmem %s0, %s325
      %s327 = sadd.s32 %s23, %s24
      %s328 = smul.u32 2, %s327
      %s329 = sadd.s32 %s23, %s24
      %s330 = smul.u32 2, %s329
      %p331 = scmp.lt.s32.totalorder %s22, 1
      %s332 = scalar_select %p331, %s22, 1
      %p333 = scmp.lt.s32.totalorder %s330, 1
      %s334 = scalar_select %p333, %s330, 1
      %s335 = smul.addr %s332, 2
      %s336 = sadd.s32 %s334, %s335
      %s337 = scalar_lea.vmem %s1, %s336
      %s338 = sadd.s32 %s23, %s24
      %s339 = smul.u32 2, %s338
      %p340 = scmp.lt.s32.totalorder %s22, 1
      %s341 = scalar_select %p340, %s22, 1
      %p342 = scmp.lt.s32.totalorder %s23, 0
      %s343 = scalar_select %p342, %s23, 0
      %s344 = sadd.s32 %s343, %s341
      %s345 = smul.addr %s344, 4
      %s346 = scalar_lea.vmem %s2, %s345
      %p347 = scmp.lt.s32.totalorder %s22, 1
      %s348 = scalar_select %p347, %s22, 1
      %p349 = scmp.lt.s32.totalorder %s23, 0
      %s350 = scalar_select %p349, %s23, 0
      %s351 = sadd.s32 %s350, %s348
      %s352 = smul.addr %s351, 4
      %s353 = scalar_lea.vmem %s3, %s352
      %p354 = scmp.lt.s32.totalorder %s22, 1
      %s355 = scalar_select %p354, %s22, 1
      %p356 = scmp.lt.s32.totalorder %s23, 0
      %s357 = scalar_select %p356, %s23, 0
      %s358 = sadd.s32 %s357, %s355
      %s359 = smul.addr %s358, 4
      %s360 = scalar_lea.vmem %s4, %s359
      %p361 = scmp.lt.s32.totalorder %s22, 1
      %s362 = scalar_select %p361, %s22, 1
      %p363 = scmp.lt.s32.totalorder %s23, 0
      %s364 = scalar_select %p363, %s23, 0
      %s365 = sadd.s32 %s364, %s362
      %s366 = smul.addr %s365, 2
      %s367 = scalar_lea.vmem %s5, %s366
      %p368 = scmp.eq.s32.totalorder %s24, 0
      // Predicated region
      $region29: #{tpu_custom_call.1} parent=27 // pred_check
        %p369 = pneg %p368
      $region30: #{tpu_custom_call.1} parent=27 // pred_check_branch
        %371 = sbr.rel (%p369) target = $region32
      $region31: #{tpu_custom_call.1} parent=27 // pred_region
        %vm372 = vcmask 2048
        %373 = vst.msk [vmem:[%s346] sm:$0x7] %vm372, 0.0
        %374 = vst.msk [vmem:[%s353] sm:$0x7] %vm372, 0.0
        %375 = vst.msk [vmem:[%s360] sm:$0x7] %vm372, 0.0
        %vm376 = vcmask 1024
        %377 = vst.msk [vmem:[%s367] sm:$0x3] %vm376, 0.0
      $region32: #{tpu_custom_call.1} parent=27 // pred_fallthru
        _
      %v378 = vld [vmem:[%s326] sm:$0xff]
      %v379 = vld [vmem:[%s326 + $0x8] sm:$0xff]
      %v380 = vld [vmem:[%s326 + $0x10] sm:$0x7]
      %v381 = vld [vmem:[%s326 + $0x18] sm:$0x7]
      %v382 = vld [vmem:[%s337] sm:$0x3]
      %v383 = vlaneseq
      %v384 = vshrl.u32 %v383, 7
      %v385 = vadd.s32 %v384, 8
      %vm386 = vcmp.ne.s32.totalorder %v384, 10
      %vm387 = vcmp.ne.s32.totalorder %v385, 10
      %v388 = vsel %vm386, 1, 0
      %v389 = vsel %vm387, 1, 0
      %vm390 = vcmp.eq.s32.totalorder %v388, 1
      %vm391 = vcmp.eq.s32.totalorder %v389, 1
      %v392 = vsel %vm390, %v378, 0.0
      %v393 = vsel %vm390, %v379, 0.0
      %v394 = vsel %vm391, %v380, 0.0
      %v395 = vsel %vm391, %v381, 0.0
      %vm396 = vcmp.eq.s32.totalorder %v382, 11
      %v397 = vsel %vm396, 0, %v382
      %vm398 = vcmask 1042432
      %v399 = vsel %vm398, %v394, -inf
      %v400 = vmax.f32 %v392, %v399
      %v401 = vrot.slane %v400, 4
      %v402 = vmax.f32 %v400, %v401
      %v403 = vrot.slane %v402, 2
      %v404 = vmax.f32 %v402, %v403
      %v405 = vrot.slane %v404, 1
      %v406 = vmax.f32 %v404, %v405
      %v407 = vsel %vm398, %v395, -inf
      %v408 = vmax.f32 %v393, %v407
      %v409 = vrot.slane %v408, 4
      %v410 = vmax.f32 %v408, %v409
      %v411 = vrot.slane %v410, 2
      %v412 = vmax.f32 %v410, %v411
      %v413 = vrot.slane %v412, 1
      %v414 = vmax.f32 %v412, %v413
      %v415 = vsub.f32 %v392, %v406
      %v416 = vsub.f32 %v393, %v414
      %v417 = vsub.f32 %v394, %v406
      %v418 = vsub.f32 %v395, %v414
      %v419 = vmul.f32 %v415, 1.442695
      %v420 = vpow.pop %v419
      %v421 = vmul.f32 %v416, 1.442695
      %v422 = vpow.pop %v421
      %v423 = vmul.f32 %v417, 1.442695
      %v424 = vpow.pop %v423
      %v425 = vmul.f32 %v418, 1.442695
      %v426 = vpow.pop %v425
      %v427 = vsel %vm398, %v424, 0.0
      %v428 = vadd.f32 %v420, %v427
      %v429 = vrot.slane %v428, 4
      %v430 = vadd.f32 %v428, %v429
      %v431 = vrot.slane %v430, 2
      %v432 = vadd.f32 %v430, %v431
      %v433 = vrot.slane %v432, 1
      %v434 = vadd.f32 %v432, %v433
      %v435 = vsel %vm398, %v426, 0.0
      %v436 = vadd.f32 %v422, %v435
      %v437 = vrot.slane %v436, 4
      %v438 = vadd.f32 %v436, %v437
      %v439 = vrot.slane %v438, 2
      %v440 = vadd.f32 %v438, %v439
      %v441 = vrot.slane %v440, 1
      %v442 = vadd.f32 %v440, %v441
      %vm443 = vcmp.ne.s32.totalorder %v384, 1
      %vm444 = vcmp.ne.s32.totalorder %v385, 1
      %vm445 = vcmp.ne.s32.totalorder %v384, 3
      %vm446 = vcmp.ne.s32.totalorder %v385, 3
      %vm447 = vmand %vm443, %vm445
      %vm448 = vmand %vm444, %vm446
      %v449 = vsel %vm447, 1, 0
      %v450 = vsel %vm448, 1, 0
      %vm451 = vcmp.eq.s32.totalorder %v449, 1
      %vm452 = vcmp.eq.s32.totalorder %v450, 1
      %v453 = vsel %vm451, %v420, 0.0
      %v454 = vsel %vm451, %v422, 0.0
      %v455 = vsel %vm452, %v424, 0.0
      %v456 = vsel %vm452, %v426, 0.0
      %v457 = vsel %vm398, %v455, -inf
      %v458 = vmax.f32 %v453, %v457
      %v459 = vrot.slane %v458, 4
      %v460 = vmax.f32 %v458, %v459
      %v461 = vrot.slane %v460, 2
      %v462 = vmax.f32 %v460, %v461
      %v463 = vrot.slane %v462, 1
      %v464 = vmax.f32 %v462, %v463
      %v465 = vsel %vm398, %v456, -inf
      %v466 = vmax.f32 %v454, %v465
      %v467 = vrot.slane %v466, 4
      %v468 = vmax.f32 %v466, %v467
      %v469 = vrot.slane %v468, 2
      %v470 = vmax.f32 %v468, %v469
      %v471 = vrot.slane %v470, 1
      %v472 = vmax.f32 %v470, %v471
      %v473 = vrcp.pop %v434
      %v474 = vmul.f32 %v464, %v473
      %v475 = vrcp.pop %v442
      %v476 = vmul.f32 %v472, %v475
      %v479 = vrot.slane %v392, 2
      %v480 = vrot.slane %v393, 2
      %v483 = vmax.f32 %v392, %v479
      %v484 = vmax.f32 %v393, %v480
      %v485 = vmax.f32 %v474, %v483
      %v486 = vmax.f32 %v476, %v484
      %v487 = vsub.f32 %v406, %v485
      %v488 = vsub.f32 %v414, %v486
      %v489 = vmul.f32 %v487, 1.442695
      %v490 = vpow.pop %v489
      %v491 = vmul.f32 %v488, 1.442695
      %v492 = vpow.pop %v491
      %v493 = vsub.f32 %v474, %v485
      %v494 = vsub.f32 %v476, %v486
      %v495 = vmul.f32 %v493, 1.442695
      %v496 = vpow.pop %v495
      %v497 = vmul.f32 %v494, 1.442695
      %v498 = vpow.pop %v497
      %v499 = vmul.f32 %v420, %v490
      %v500 = vmul.f32 %v422, %v492
      %v503 = vrot.slane %v490, 6
      %v504 = vrot.slane %v492, 6
      %v507 = vmul.f32 %v420, %v503
      %v508 = vmul.f32 %v422, %v504
      %v511 = vrot.slane %v496, 1
      %v512 = vrot.slane %v498, 1
      %v517 = vrot.slane %v507, 1
      %v518 = vrot.slane %v508, 1
      %vm521 = vcmask 1040384
      %v522 = vsel %vm521, %v511, %v499
      %v523 = vsel %vm521, %v512, %v500
      %vm524 = vcmask 1041408
      %v525 = vsel %vm524, %v522, %v517
      %v526 = vsel %vm524, %v523, %v518
      %v527 = vrot.slane %v392, 1
      %v528 = vrot.slane %v393, 1
      %v531 = vsel %vm521, %v474, %v392
      %v532 = vsel %vm521, %v476, %v393
      %v533 = vsel %vm524, %v531, %v527
      %v534 = vsel %vm524, %v532, %v528
      %vm535 = vcmp.eq.s32.totalorder %v397, 1
      %v536 = vsel %vm535, 1, 0
      %vm537 = vcmp.eq.s32.totalorder %v397, 3
      %v538 = vsel %vm537, 2, %v536
      %v539 = vsel %vm398, %v525, 0.0
      %v540 = vrot.slane %v539, 4
      %v541 = vadd.f32 %v539, %v540
      %v542 = vrot.slane %v541, 2
      %v543 = vadd.f32 %v541, %v542
      %v544 = vrot.slane %v543, 1
      %v545 = vadd.f32 %v543, %v544
      %v546 = vsel %vm398, %v526, 0.0
      %v547 = vrot.slane %v546, 4
      %v548 = vadd.f32 %v546, %v547
      %v549 = vrot.slane %v548, 2
      %v550 = vadd.f32 %v548, %v549
      %v551 = vrot.slane %v550, 1
      %v552 = vadd.f32 %v550, %v551
      %v553 = vrcp.pop %v545
      %v554 = vmul.f32 1.0, %v553
      %v555 = vrcp.pop %v552
      %v556 = vmul.f32 1.0, %v555
      %v557 = vmul.f32 %v525, %v554
      %v558 = vmul.f32 %v526, %v556
      %v559 = vlaneseq
      %v560 = vshrl.u32 %v559, 7
      %v561 = vsub.s32 0, %v560
      %v562 = vrot.slane %v538, %v561
      %v563 = vlaneseq
      %v564 = vshrl.u32 %v563, 7
      %v565 = vsub.s32 1, %v564
      %v566 = vrot.slane %v538, %v565
      %vm567 = vcmp.eq.s32.totalorder %v384, %v562
      %vm568 = vcmp.eq.s32.totalorder %v384, %v566
      %vm569 = vcmp.ne.s32.totalorder %v538, 255
      %v570 = vsel %vm567, 1, 0
      %v571 = vsel %vm568, 1, 0
      %v572 = vcvt.s32.f32 %v570
      %v573 = vcvt.s32.f32 %v571
      %v574 = vsel %vm569, 1, 0
      %v575 = vcvt.s32.f32 %v574
      %v576 = vmul.f32 %v572, %v533
      %v577 = vmul.f32 %v573, %v534
      %v578 = vsel %vm398, %v576, 0.0
      %v579 = vrot.slane %v578, 4
      %v580 = vadd.f32 %v578, %v579
      %v581 = vrot.slane %v580, 2
      %v582 = vadd.f32 %v580, %v581
      %v583 = vrot.slane %v582, 1
      %v584 = vadd.f32 %v582, %v583
      %v585 = vsel %vm398, %v577, 0.0
      %v586 = vrot.slane %v585, 4
      %v587 = vadd.f32 %v585, %v586
      %v588 = vrot.slane %v587, 2
      %v589 = vadd.f32 %v587, %v588
      %v590 = vrot.slane %v589, 1
      %v591 = vadd.f32 %v589, %v590
      %v592 = vlog2.pop %v545
      %v593 = vmul.f32 %v592, 0.6931472
      %v594 = vlog2.pop %v552
      %v595 = vmul.f32 %v594, 0.6931472
      %v596 = vadd.f32 %v485, %v593
      %v597 = vadd.f32 %v486, %v595
      %v598 = vsub.f32 %v596, %v584
      %v599 = vsub.f32 %v597, %v591
      %v601 = vlaneseq
      %v602 = vshrl.u32 %v601, 7
      %v603 = vsub.s32 0, %v602
      %v604 = vrot.slane %v575, %v603
      %v605 = vlaneseq
      %v606 = vshrl.u32 %v605, 7
      %v607 = vsub.s32 1, %v606
      %v608 = vrot.slane %v575, %v607
      %v611 = vmul.f32 %v598, %v604
      %v612 = vmul.f32 %v599, %v608
      %v615 = vrot.slane %v611, 1
      %v616 = vrot.slane %v612, 1
      %v619 = vsel %vm521, %v615, 0.0
      %v620 = vsel %vm521, %v616, 0.0
      %v621 = vadd.f32 %v619, %v620
      %622 = vadd.xlane.f32.xlu0 %v621
      %v623 = vpop.xlane.xlu0 %622
      %v624 = vrot.slane %v623, 4
      %v625 = vadd.f32 %v623, %v624
      %v626 = vrot.slane %v625, 2
      %v627 = vadd.f32 %v625, %v626
      %v628 = vrot.slane %v627, 1
      %v629 = vadd.f32 %v627, %v628
      %s630 = vtos %v629
      %v631 = vstv %s630
      %v632 = vsel %vm521, %v604, 0.0
      %v633 = vsel %vm521, %v608, 0.0
      %v634 = vadd.f32 %v632, %v633
      %635 = vadd.xlane.f32.xlu0 %v634
      %v636 = vpop.xlane.xlu0 %635
      %v637 = vrot.slane %v636, 4
      %v638 = vadd.f32 %v636, %v637
      %v639 = vrot.slane %v638, 2
      %v640 = vadd.f32 %v638, %v639
      %v641 = vrot.slane %v640, 1
      %v642 = vadd.f32 %v640, %v641
      %s643 = vtos %v642
      %v644 = vstv %s643
      %v645 = vld [vmem:[%s346] sm:$0x7]
      %v646 = vmul.f32 %v557, %v572
      %v647 = vmul.f32 %v558, %v573
      %v648 = vsel %vm398, %v646, 0.0
      %v649 = vsel %vm398, %v647, 0.0
      %v650 = vadd.f32 %v648, %v649
      %651 = vadd.xlane.f32.xlu0 %v650
      %v652 = vpop.xlane.xlu0 %651
      %v653 = vadd.f32 %v645, %v652
      %vm654 = vcmask 2048
      %655 = vst.msk [vmem:[%s346] sm:$0x7] %vm654, %v653
      %v656 = vld [vmem:[%s353] sm:$0x7]
      %v657 = vsel %vm398, %v557, 0.0
      %v658 = vsel %vm398, %v558, 0.0
      %v659 = vadd.f32 %v657, %v658
      %660 = vadd.xlane.f32.xlu0 %v659
      %v661 = vpop.xlane.xlu0 %660
      %v662 = vadd.f32 %v656, %v661
      %663 = vst.msk [vmem:[%s353] sm:$0x7] %vm654, %v662
      %v664 = vld [vmem:[%s360] sm:$0x7]
      %v665 = vsel %vm398, %v572, 0.0
      %v666 = vsel %vm398, %v573, 0.0
      %v667 = vadd.f32 %v665, %v666
      %668 = vadd.xlane.f32.xlu0 %v667
      %v669 = vpop.xlane.xlu0 %668
      %v670 = vadd.f32 %v664, %v669
      %671 = vst.msk [vmem:[%s360] sm:$0x7] %vm654, %v670
      %v672 = vld [vmem:[%s367] sm:$0x1]
      %v673 = vadd.f32 %v672, %v631
      %vm674 = vcmask 0
      %675 = vst.msk [vmem:[%s367] sm:$0x1] %vm674, %v673
      %v676 = vld [vmem:[%s367 + $0x1] sm:$0x1]
      %v677 = vadd.f32 %v676, %v644
      %678 = vst.msk [vmem:[%s367 + $0x1] sm:$0x1] %vm674, %v677
      %p679 = scmp.lt.s32.totalorder %s22, 1
      %s680 = scalar_select %p679, %s22, 1
      %p681 = scmp.lt.s32.totalorder %s23, 0
      %s682 = scalar_select %p681, %s23, 0
      %s683 = sadd.s32 %s682, %s680
      %s684 = smul.addr %s683, 4
      %s685 = scalar_lea.vmem %s2, %s684
      %p686 = scmp.lt.s32.totalorder %s22, 1
      %s687 = scalar_select %p686, %s22, 1
      %p688 = scmp.lt.s32.totalorder %s23, 0
      %s689 = scalar_select %p688, %s23, 0
      %s690 = sadd.s32 %s689, %s687
      %s691 = smul.addr %s690, 4
      %s692 = scalar_lea.vmem %s3, %s691
      %p693 = scmp.lt.s32.totalorder %s22, 1
      %s694 = scalar_select %p693, %s22, 1
      %p695 = scmp.lt.s32.totalorder %s23, 0
      %s696 = scalar_select %p695, %s23, 0
      %s697 = sadd.s32 %s696, %s694
      %s698 = smul.addr %s697, 4
      %s699 = scalar_lea.vmem %s4, %s698
      %p700 = scmp.lt.s32.totalorder %s22, 1
      %s701 = scalar_select %p700, %s22, 1
      %p702 = scmp.lt.s32.totalorder %s23, 0
      %s703 = scalar_select %p702, %s23, 0
      %s704 = sadd.s32 %s703, %s701
      %s705 = smul.addr %s704, 2
      %s706 = scalar_lea.vmem %s5, %s705
      // Predicated region
      $region33: #{tpu_custom_call.1} parent=27 // pred_check
        %p707 = pneg %p116
      $region34: #{tpu_custom_call.1} parent=27 // pred_check_branch
        %709 = sbr.rel (%p707) target = $region36
      $region35: #{tpu_custom_call.1} parent=27 // pred_region
        _
      $region36: #{tpu_custom_call.1} parent=27 // pred_fallthru
        _
      // Predicated region
      $region37: #{tpu_custom_call.1} parent=27 // pred_check
        %p710 = pneg %p144
      $region38: #{tpu_custom_call.1} parent=27 // pred_check_branch
        %712 = sbr.rel (%p710) target = $region40
      $region39: #{tpu_custom_call.1} parent=27 // pred_region
        _
      $region40: #{tpu_custom_call.1} parent=27 // pred_fallthru
        _
      // Predicated region
      $region41: #{tpu_custom_call.1} parent=27 // pred_check
        %p713 = pneg %p172
      $region42: #{tpu_custom_call.1} parent=27 // pred_check_branch
        %715 = sbr.rel (%p713) target = $region44
      $region43: #{tpu_custom_call.1} parent=27 // pred_region
        _
      $region44: #{tpu_custom_call.1} parent=27 // pred_fallthru
        _
      // Predicated region
      $region45: #{tpu_custom_call.1} parent=27 // pred_check
        %p716 = pneg %p200
      $region46: #{tpu_custom_call.1} parent=27 // pred_check_branch
        %718 = sbr.rel (%p716) target = $region48
      $region47: #{tpu_custom_call.1} parent=27 // pred_region
        _
      $region48: #{tpu_custom_call.1} parent=27 // pred_fallthru
        _
    $region28: #{tpu_custom_call.1} parent=5 // pred_fallthru
      _
    %p719 = scmp.le.s32.totalorder 2, %s12
    // Predicated region
    $region49: #{tpu_custom_call.1} parent=5 // pred_check
      %p720 = pneg %p719
    $region50: #{tpu_custom_call.1} parent=5 // pred_check_branch
      %722 = sbr.rel (%p720) target = $region52
    $region51: #{tpu_custom_call.1} parent=5 // pred_region
      %s723 = ssub.s32 %s12, 2
      // Predicated region
      $region53: #{tpu_custom_call.1} parent=51 // pred_check
        %p724 = pneg %p122
      $region54: #{tpu_custom_call.1} parent=51 // pred_check_branch
        %726 = sbr.rel (%p724) target = $region56
      $region55: #{tpu_custom_call.1} parent=51 // pred_region
        %p727 = scmp.lt.s32.totalorder %s25, 1
        %s728 = scalar_select %p727, %s25, 1
        %p729 = scmp.lt.s32.totalorder %s26, 0
        %s730 = scalar_select %p729, %s26, 0
        %s731 = sadd.s32 %s730, %s728
        %s732 = smul.addr %s731, 4
        %s733 = scalar_lea.vmem %s2, %s732
      $region56: #{tpu_custom_call.1} parent=51 // pred_fallthru
        _
      // Predicated region
      $region57: #{tpu_custom_call.1} parent=51 // pred_check
        %p734 = pneg %p150
      $region58: #{tpu_custom_call.1} parent=51 // pred_check_branch
        %736 = sbr.rel (%p734) target = $region60
      $region59: #{tpu_custom_call.1} parent=51 // pred_region
        %p737 = scmp.lt.s32.totalorder %s25, 1
        %s738 = scalar_select %p737, %s25, 1
        %p739 = scmp.lt.s32.totalorder %s26, 0
        %s740 = scalar_select %p739, %s26, 0
        %s741 = sadd.s32 %s740, %s738
        %s742 = smul.addr %s741, 4
        %s743 = scalar_lea.vmem %s3, %s742
      $region60: #{tpu_custom_call.1} parent=51 // pred_fallthru
        _
      // Predicated region
      $region61: #{tpu_custom_call.1} parent=51 // pred_check
        %p744 = pneg %p178
      $region62: #{tpu_custom_call.1} parent=51 // pred_check_branch
        %746 = sbr.rel (%p744) target = $region64
      $region63: #{tpu_custom_call.1} parent=51 // pred_region
        %p747 = scmp.lt.s32.totalorder %s25, 1
        %s748 = scalar_select %p747, %s25, 1
        %p749 = scmp.lt.s32.totalorder %s26, 0
        %s750 = scalar_select %p749, %s26, 0
        %s751 = sadd.s32 %s750, %s748
        %s752 = smul.addr %s751, 4
        %s753 = scalar_lea.vmem %s4, %s752
      $region64: #{tpu_custom_call.1} parent=51 // pred_fallthru
        _
      // Predicated region
      $region65: #{tpu_custom_call.1} parent=51 // pred_check
        %p754 = pneg %p206
      $region66: #{tpu_custom_call.1} parent=51 // pred_check_branch
        %756 = sbr.rel (%p754) target = $region68
      $region67: #{tpu_custom_call.1} parent=51 // pred_region
        %p757 = scmp.lt.s32.totalorder %s25, 1
        %s758 = scalar_select %p757, %s25, 1
        %p759 = scmp.lt.s32.totalorder %s26, 0
        %s760 = scalar_select %p759, %s26, 0
        %s761 = sadd.s32 %s760, %s758
        %s762 = smul.addr %s761, 2
        %s763 = scalar_lea.vmem %s5, %s762
      $region68: #{tpu_custom_call.1} parent=51 // pred_fallthru
        _
    $region52: #{tpu_custom_call.1} parent=5 // pred_fallthru
      _
  $region6: #{tpu_custom_call.1} parent=0 // loop_footer
    %s16 = sadd.s32 1, %s12
  $region7: #{tpu_custom_call.1} parent=0 // loop_footer_branch
    %11 = sbr.rel target = $region3
  $region8: #{tpu_custom_call.1} parent=0 // loop_exit
    _

</llo_original>
